<compile_context>
chip_gen: v5e
topology: v5e:2x2
jax: 0.10.0
libtpu: 0.0.40
codegen_flags: <defaults>
</compile_context>

<pallas_src>
import math
import functools

import jax
import jax.numpy as jnp
from jax.experimental import pallas as pl
from jax.experimental.pallas import tpu as pltpu


# MXU operand dtype (accumulation is always f32).  bf16 is native on v5e/v6e/v7x.
MXU_DTYPE = jnp.bfloat16
# Weight storage dtype (halves weight DMA).
# TODO(synk): on v7x, fp8 weights (+ per-channel scales in the epilogue) for
# w_qkvc / wi / wf would halve weight DMA again.
WEIGHT_DTYPE = jnp.bfloat16

_SQRT1_2 = 0.7071067811865476


def _round_up(x, m):
    return (x + m - 1) // m * m


def _pick_tile(dim, cap, align):
    """Tile choice: full dim when it fits the cap (no padding, always legal);
    otherwise the largest `align`-multiple <= cap dividing the padded dim."""
    if dim <= cap:
        return dim
    dp = _round_up(dim, align)
    for t in range(cap, align - 1, -align):
        if dp % t == 0:
            return t
    return cap


def _gelu_erf(x):
    # Exact (erf-based) GELU.  erf via Abramowitz–Stegun 7.1.26 polynomial
    # (|error| <= 1.5e-7) using only mul/add/exp/where, so it lowers in Mosaic.
    z = x * _SQRT1_2
    az = jnp.abs(z)
    t = 1.0 / (1.0 + 0.3275911 * az)
    poly = t * (0.254829592 + t * (-0.284496736 + t * (1.421413741
               + t * (-1.453152027 + t * 1.061405429))))
    erf_az = 1.0 - poly * jnp.exp(-az * az)
    erf_z = jnp.where(z >= 0, erf_az, -erf_az)
    return 0.5 * x * (1.0 + erf_z)


def _shift_rows(x, s):
    """Row i of result = x[i + s], zero outside [0, L). Static shift, in-VMEM."""
    if s == 0:
        return x
    L = x.shape[0]
    if abs(s) >= L:
        return jnp.zeros_like(x)
    z = jnp.zeros((abs(s),) + x.shape[1:], x.dtype)
    if s > 0:
        return jnp.concatenate([x[s:], z], axis=0)
    return jnp.concatenate([z, x[:s]], axis=0)


# --------------------------- tiled dense matmuls ----------------------------

def _matmul_bias_kernel(x_ref, w_ref, b_ref, o_ref, acc_ref, *, activation):
    @pl.when(pl.program_id(2) == 0)
    def _():
        acc_ref[...] = jnp.zeros_like(acc_ref)

    acc_ref[...] += jnp.dot(x_ref[...].astype(MXU_DTYPE),
                            w_ref[...].astype(MXU_DTYPE),
                            preferred_element_type=jnp.float32)

    @pl.when(pl.program_id(2) == pl.num_programs(2) - 1)
    def _():
        y = acc_ref[...] + b_ref[...]
        if activation is not None:
            y = activation(y)
        o_ref[...] = y.astype(o_ref.dtype)


def dense(x2d, w, b, *, activation=None, out_dtype=jnp.float32,
          tm=512, tn=512, tk=1024):
    """out = act(x2d @ w + b), tiled over (M, N, K) with a VMEM f32 accumulator.
    Full-dim blocks (no padding) are used whenever a dim fits the tile cap."""
    M, K = x2d.shape
    N = w.shape[1]
    tm = _pick_tile(M, tm, 16)
    tn = _pick_tile(N, tn, 128)
    tk = _pick_tile(K, tk, 128)
    Mp, Np, Kp = _round_up(M, tm), _round_up(N, tn), _round_up(K, tk)
    xp = x2d if (Mp, Kp) == (M, K) else jnp.pad(x2d, ((0, Mp - M), (0, Kp - K)))
    wp = w if (Kp, Np) == (K, N) else jnp.pad(w, ((0, Kp - K), (0, Np - N)))
    bp = (b if Np == N else jnp.pad(b, (0, Np - N))).reshape(1, Np)
    grid = (Mp // tm, Np // tn, Kp // tk)
    out = pl.pallas_call(
        functools.partial(_matmul_bias_kernel, activation=activation),
        grid=grid,
        out_shape=jax.ShapeDtypeStruct((Mp, Np), out_dtype),
        in_specs=[pl.BlockSpec((tm, tk), lambda i, j, k: (i, k)),
                  pl.BlockSpec((tk, tn), lambda i, j, k: (k, j)),
                  pl.BlockSpec((1, tn), lambda i, j, k: (0, j))],
        out_specs=pl.BlockSpec((tm, tn), lambda i, j, k: (i, j)),
        scratch_shapes=[pltpu.VMEM((tm, tn), jnp.float32)],
        compiler_params=pltpu.CompilerParams(
            dimension_semantics=("parallel", "parallel", "arbitrary")),
    )(xp, wp, bp)
    return out[:M, :N]


def _dense_add_ln_kernel(x_ref, w_ref, b_ref, r_ref, g_ref, bb_ref, o_ref,
                         acc_ref, *, eps):
    @pl.when(pl.program_id(1) == 0)
    def _():
        acc_ref[...] = jnp.zeros_like(acc_ref)

    acc_ref[...] += jnp.dot(x_ref[...].astype(MXU_DTYPE),
                            w_ref[...].astype(MXU_DTYPE),
                            preferred_element_type=jnp.float32)

    @pl.when(pl.program_id(1) == pl.num_programs(1) - 1)
    def _():
        h = acc_ref[...] + b_ref[...] + r_ref[...]
        mu = jnp.mean(h, axis=-1, keepdims=True)
        d = h - mu
        var = jnp.mean(d * d, axis=-1, keepdims=True)
        o_ref[...] = (d * jax.lax.rsqrt(var + eps) * g_ref[...]
                      + bb_ref[...]).astype(o_ref.dtype)


def dense_add_layernorm(x2d, w, b, res2d, gamma, beta, *, eps=1e-12,
                        tm=512, tk=1024):
    """LayerNorm(x2d @ w + b + res2d) fused; N (=D) kept whole for the LN."""
    M, K = x2d.shape
    N = w.shape[1]
    tm = _pick_tile(M, tm, 16)
    tk = _pick_tile(K, tk, 128)
    Mp, Kp = _round_up(M, tm), _round_up(K, tk)
    xp = x2d if (Mp, Kp) == (M, K) else jnp.pad(x2d, ((0, Mp - M), (0, Kp - K)))
    wp = w if Kp == K else jnp.pad(w, ((0, Kp - K), (0, 0)))
    rp = res2d if Mp == M else jnp.pad(res2d, ((0, Mp - M), (0, 0)))
    grid = (Mp // tm, Kp // tk)
    out = pl.pallas_call(
        functools.partial(_dense_add_ln_kernel, eps=eps),
        grid=grid,
        out_shape=jax.ShapeDtypeStruct((Mp, N), jnp.float32),
        in_specs=[pl.BlockSpec((tm, tk), lambda i, k: (i, k)),
                  pl.BlockSpec((tk, N), lambda i, k: (k, 0)),
                  pl.BlockSpec((1, N), lambda i, k: (0, 0)),
                  pl.BlockSpec((tm, N), lambda i, k: (i, 0)),
                  pl.BlockSpec((1, N), lambda i, k: (0, 0)),
                  pl.BlockSpec((1, N), lambda i, k: (0, 0))],
        out_specs=pl.BlockSpec((tm, N), lambda i, k: (i, 0)),
        scratch_shapes=[pltpu.VMEM((tm, N), jnp.float32)],
        compiler_params=pltpu.CompilerParams(
            dimension_semantics=("parallel", "arbitrary")),
    )(xp, wp, b.reshape(1, N), rp, gamma.reshape(1, N), beta.reshape(1, N))
    return out[:M]


# ------------------------ attention (all heads / batch) ---------------------

def _attention_kernel(qkvc_ref, m_ref, o_ref, *, Hn, dh, A, inv_sqrt_dh):
    m = m_ref[0]                                  # (1, L) additive mask, f32
    qkv = qkvc_ref[0]                             # (L, 4A) bf16 fused slab
    outs = []
    for h in range(Hn):
        q = qkv[:, h * dh:(h + 1) * dh]
        k = qkv[:, A + h * dh:A + (h + 1) * dh]
        v = qkv[:, 2 * A + h * dh:2 * A + (h + 1) * dh]
        s = jax.lax.dot_general(q, k, (((1,), (1,)), ((), ())),
                                preferred_element_type=jnp.float32)
        s = s * inv_sqrt_dh + m
        s = s - jnp.max(s, axis=-1, keepdims=True)
        p = jnp.exp(s)
        p = p / jnp.sum(p, axis=-1, keepdims=True)
        outs.append(jnp.dot(p.astype(MXU_DTYPE), v,
                            preferred_element_type=jnp.float32))
    # single lane-dense (L, A) store instead of Hn sub-128-lane partial stores
    o_ref[0] = jnp.concatenate(outs, axis=-1).astype(o_ref.dtype)


def attention(qkvc, ext_mask, *, Hn, dh, A):
    # qkvc: (B, L, 4A) fused [q | k | v | conv_out] slab (bf16); ext_mask: (B, 1, L)
    # TODO(synk): for production L (~1k) add (q-tile, head) grid axes and a
    # flash-style streaming softmax so the (L,L) scores and (L,4A) slab fit
    # v7x's 64 MiB VMEM and feed both TensorCores.
    B, L, _ = qkvc.shape
    kern = functools.partial(_attention_kernel, Hn=Hn, dh=dh, A=A,
                             inv_sqrt_dh=1.0 / math.sqrt(dh))
    return pl.pallas_call(
        kern,
        grid=(B,),
        out_shape=jax.ShapeDtypeStruct((B, L, A), jnp.bfloat16),
        in_specs=[pl.BlockSpec((1, L, 4 * A), lambda b: (b, 0, 0)),
                  pl.BlockSpec((1, 1, L), lambda b: (b, 0, 0))],
        out_specs=pl.BlockSpec((1, L, A), lambda b: (b, 0, 0)),
        compiler_params=pltpu.CompilerParams(dimension_semantics=("parallel",)),
    )(qkvc, ext_mask)


# ------------------- fused conv branch (one kernel / batch) -----------------

def _conv_branch_kernel(x_ref, qkvc_ref, dw_ref, pw_ref, pwb_ref,
                        wck_ref, bck_ref, o_ref, *, L, K, Hn, dh, A):
    x = x_ref[0].astype(jnp.float32)              # (L, D)
    qkv = qkvc_ref[0]                             # (L, 4A) bf16
    dw = dw_ref[...]                              # (K, D) f32
    half = K // 2

    # depthwise 'same' conv handled fully in-kernel (no wrapper pad copies)
    acc = x * dw[half:half + 1, :]
    for k in range(K):
        s = k - half
        if s == 0:
            continue
        acc = acc + _shift_rows(x, s) * dw[k:k + 1, :]

    # pointwise 1x1 conv + bias  -> key_conv (L, A)
    key_conv = jnp.dot(acc.astype(MXU_DTYPE), pw_ref[...],
                       preferred_element_type=jnp.float32) + pwb_ref[...]
    # conv_attn = key_conv * q ; kernel-logit projection (L, Hn*K)
    q = qkv[:, 0:A].astype(jnp.float32)
    conv_attn = key_conv * q
    kl = jnp.dot(conv_attn.astype(MXU_DTYPE), wck_ref[...],
                 preferred_element_type=jnp.float32) + bck_ref[...]

    co = qkv[:, 3 * A:4 * A].astype(jnp.float32)  # conv_out projection (L, A)

    # span-based dynamic convolution; per-head results are buffered and written
    # with a single lane-dense (L, A) store.
    # TODO(synk): the 7-lane kl[:, h*K:(h+1)*K] slices still relayout; pad the
    # per-head kernel-logit group stride to a lane multiple at production scale.
    outs = []
    for h in range(Hn):
        klh = kl[:, h * K:(h + 1) * K]
        klh = klh - jnp.max(klh, axis=-1, keepdims=True)
        p = jnp.exp(klh)
        p = p / jnp.sum(p, axis=-1, keepdims=True)
        coh = co[:, h * dh:(h + 1) * dh]
        ctx = coh * p[:, half:half + 1]
        for k in range(K):
            s = k - half
            if s == 0:
                continue
            ctx = ctx + _shift_rows(coh, s) * p[:, k:k + 1]
        outs.append(ctx)
    o_ref[0] = jnp.concatenate(outs, axis=-1).astype(o_ref.dtype)


def conv_branch(x, qkvc, p, *, L, D, A, Hn, dh, K):
    # x: (B, L, D) hidden (f32); qkvc: (B, L, 4A) bf16 (q at [0:A], conv_out at [3A:4A])
    # TODO(synk): tile L (with a K//2 halo) at production sequence lengths so
    # the per-batch block fits v7x's 64 MiB VMEM and adds a parallel grid axis.
    B = x.shape[0]
    kern = functools.partial(_conv_branch_kernel, L=L, K=K, Hn=Hn, dh=dh, A=A)
    return pl.pallas_call(
        kern,
        grid=(B,),
        out_shape=jax.ShapeDtypeStruct((B, L, A), jnp.bfloat16),
        in_specs=[pl.BlockSpec((1, L, D), lambda b: (b, 0, 0)),
                  pl.BlockSpec((1, L, 4 * A), lambda b: (b, 0, 0)),
                  pl.BlockSpec((K, D), lambda b: (0, 0)),
                  pl.BlockSpec((D, A), lambda b: (0, 0)),
                  pl.BlockSpec((1, A), lambda b: (0, 0)),
                  pl.BlockSpec((A, Hn * K), lambda b: (0, 0)),
                  pl.BlockSpec((1, Hn * K), lambda b: (0, 0))],
        out_specs=pl.BlockSpec((1, L, A), lambda b: (b, 0, 0)),
        compiler_params=pltpu.CompilerParams(dimension_semantics=("parallel",)),
    )(x, qkvc, p["sep_dw"], p["sep_pw"], p["sep_b"].reshape(1, A),
      p["wck"], p["bck"].reshape(1, Hn * K))


# --------------------------- contact prediction head ------------------------

def _contact_head_kernel(h_ref, ht_ref, wp_ref, b_ref, o_ref):
    # Symmetrized logits: the signed diff-feature term (h_i - h_j) @ Wd^T is
    # exactly antisymmetric in (i, j), so it cancels under (l + l^T)/2 and only
    # the prod term survives:  logits_sym[t,i,j] = sum_d h[i,d]*Wp[t,d]*h[j,d] + b[t].
    t = pl.program_id(1)
    h = h_ref[0]                                   # (L, D) f32
    wp_row = wp_ref[pl.ds(t, 1), :]                # (1, D)
    scaled = (h * wp_row).astype(MXU_DTYPE)
    o_ref[0, 0] = jnp.dot(scaled, ht_ref[0].astype(MXU_DTYPE),
                          preferred_element_type=jnp.float32) + b_ref[t]


def contact_head(hidden, wp, bias):
    # hidden: (B, L, D), wp: (T, D) prod-feature weights, bias: (T,)
    # Grid (B, T): lane-dense (1,1,L,L) output blocks, hidden pre-transposed once
    # (no per-t in-kernel transpose), per-step VMEM ~ L*L*4 bytes.
    B, L, D = hidden.shape
    T = wp.shape[0]
    hidden_t = jnp.swapaxes(hidden, 1, 2)          # (B, D, L) -- one small transpose
    return pl.pallas_call(
        _contact_head_kernel,
        grid=(B, T),
        out_shape=jax.ShapeDtypeStruct((B, T, L, L), jnp.float32),
        in_specs=[pl.BlockSpec((1, L, D), lambda b, t: (b, 0, 0)),
                  pl.BlockSpec((1, D, L), lambda b, t: (b, 0, 0)),
                  pl.BlockSpec((T, D), lambda b, t: (0, 0)),
                  pl.BlockSpec(memory_space=pltpu.MemorySpace.SMEM)],
        out_specs=pl.BlockSpec((1, 1, L, L), lambda b, t: (b, t, 0, 0)),
        compiler_params=pltpu.CompilerParams(
            dimension_semantics=("parallel", "parallel")),
    )(hidden, hidden_t, wp, bias)


# ------------------------------ model (glue) --------------------------------

def convbert_layer_forward(p, x, ext_mask, cfg):
    B, L, D = x.shape
    Hn, dh, K, A = cfg["Hn"], cfg["dh"], cfg["K"], cfg["A"]
    x2 = x.reshape(B * L, D)

    # fused Q / K / V / conv_out projection: one wide matmul (D -> 4A), bf16 slab
    qkvc = dense(x2, p["w_qkvc"], p["b_qkvc"],
                 out_dtype=jnp.bfloat16).reshape(B, L, 4 * A)

    # reduced-head self-attention: all heads per batch, one lane-dense store
    attn_ctx = attention(qkvc, ext_mask, Hn=Hn, dh=dh, A=A)          # (B, L, A)

    # conv branch (SeparableConv1D + *Q + kernel logits + span dynamic conv),
    # halo handled in-kernel (no wrapper pads)
    conv_ctx = conv_branch(x, qkvc, p, L=L, D=D, A=A, Hn=Hn, dh=dh, K=K)

    # [attention heads ..., conv heads ...] -> (B*L, D)
    context = jnp.concatenate([attn_ctx, conv_ctx], axis=-1).reshape(B * L, D)

    # ConvBertSelfOutput: dense + residual + LayerNorm (fused)
    attn_out = dense_add_layernorm(context, p["wo"], p["bo"], x2,
                                   p["ln1_g"], p["ln1_b"])
    # FFN: dense with GELU fused into the matmul epilogue (bf16 intermediate),
    # then dense + residual + LayerNorm (fused)
    inter = dense(attn_out, p["wi"], p["bi"], activation=_gelu_erf,
                  out_dtype=jnp.bfloat16)
    out = dense_add_layernorm(inter, p["wf"], p["bf"], attn_out,
                              p["ln2_g"], p["ln2_b"])
    return out.reshape(B, L, D)


def compute_contact_loss(logits, labels):
    # masked cross-entropy with ignore_index=-1 (cheap reduction, plain JAX)
    T = logits.shape[-1]
    flat_logits = logits.reshape(-1, T)
    flat_labels = labels.reshape(-1)
    valid = flat_labels != -1
    safe = jnp.where(valid, flat_labels, 0)
    logp = jax.nn.log_softmax(flat_logits, axis=-1)
    nll = -jnp.take_along_axis(logp, safe[:, None], axis=-1)[:, 0]
    num = jnp.maximum(jnp.sum(valid.astype(jnp.float32)), 1.0)
    return jnp.sum(jnp.where(valid, nll, 0.0)) / num


def convbert_contact_forward(params, embd, attention_mask=None, labels=None):
    B, L, D = embd.shape
    if attention_mask is not None:
        m = attention_mask.astype(jnp.float32)
        ext = (1.0 - m)[:, None, :] * jnp.finfo(jnp.float32).min      # (B,1,L)
    else:
        ext = jnp.zeros((B, 1, L), jnp.float32)

    h = embd.astype(jnp.float32)
    for layer_p in params["layers"]:
        h = convbert_layer_forward(layer_p, h, ext, params["cfg"])

    logits_btll = contact_head(h, params["dec_wp"], params["dec_b"])  # (B,T,L,L)
    # Reference interface layout is (B, L, L, T).
    # TODO(synk): consumers that can take (B, T, L, L) should skip this transpose
    # (a full HBM round trip of the largest tensor; T<128 lanes afterwards).
    logits = jnp.transpose(logits_btll, (0, 2, 3, 1))
    loss = compute_contact_loss(logits, labels) if labels is not None else None
    return {"loss": loss, "logits": logits}


# ----------------------------- parameter creation ---------------------------

def init_params(key, input_dim, num_heads, hidden_dim, num_hidden_layers,
                kernel_size, num_tokens):
    head_ratio = 2
    Hn = max(num_heads // head_ratio, 1)            # reduced attention heads
    dh = input_dim // num_heads                     # attention head size
    A = Hn * dh                                     # all_head_size
    D = input_dim
    K = kernel_size
    cfg = dict(Hn=Hn, dh=dh, K=K, A=A)

    def u(k, shape, scale=0.05):
        return jax.random.uniform(k, shape, jnp.float32, -scale, scale)

    keys = jax.random.split(key, num_hidden_layers + 1)
    layers = []
    for lk in keys[:num_hidden_layers]:
        ks = jax.random.split(lk, 10)
        wq, wk, wv, wco = (u(ks[0], (D, A)), u(ks[1], (D, A)),
                           u(ks[2], (D, A)), u(ks[3], (D, A)))
        layers.append(dict(
            # fused [q | k | v | conv_out] projection weight / bias (bf16 at rest)
            w_qkvc=jnp.concatenate([wq, wk, wv, wco], axis=1).astype(WEIGHT_DTYPE),
            b_qkvc=jnp.zeros((4 * A,), jnp.float32),
            sep_dw=u(ks[4], (K, D)),                               # VPU operand, f32
            sep_pw=u(ks[5], (D, A)).astype(WEIGHT_DTYPE),
            sep_b=jnp.zeros((A,), jnp.float32),
            wck=u(ks[6], (A, Hn * K)).astype(WEIGHT_DTYPE),
            bck=jnp.zeros((Hn * K,), jnp.float32),
            wo=u(ks[7], (D, D)).astype(WEIGHT_DTYPE),
            bo=jnp.zeros((D,), jnp.float32),
            ln1_g=jnp.ones((D,), jnp.float32), ln1_b=jnp.zeros((D,), jnp.float32),
            wi=u(ks[8], (D, hidden_dim)).astype(WEIGHT_DTYPE),
            bi=jnp.zeros((hidden_dim,), jnp.float32),
            wf=u(ks[9], (hidden_dim, D)).astype(WEIGHT_DTYPE),
            bf=jnp.zeros((D,), jnp.float32),
            ln2_g=jnp.ones((D,), jnp.float32), ln2_b=jnp.zeros((D,), jnp.float32),
        ))

    # ContactPredictionHead.reset_parameters: bias = 0, weight ~ U(-0.1, 0.1).
    # Only the prod-feature half of the decoder weight is needed: the signed
    # diff-feature term is antisymmetric and cancels under (l + l^T)/2.
    dec_w = jax.random.uniform(keys[-1], (num_tokens, 2 * D), jnp.float32, -0.1, 0.1)
    return dict(
        layers=layers, cfg=cfg,
        dec_wp=dec_w[:, :D],                        # (T, D) prod-feature weights
        dec_b=jnp.zeros((num_tokens,), jnp.float32),
    )


# ----------------------------------- demo ------------------------------------

if __name__ == "__main__":
    B, L = 2, 8
    input_dim, num_heads, hidden_dim = 32, 4, 64
    kernel_size, num_tokens = 7, 2

    key = jax.random.PRNGKey(0)
    pkey, xkey, lkey = jax.random.split(key, 3)
    params = init_params(pkey, input_dim, num_heads, hidden_dim,
                         num_hidden_layers=1, kernel_size=kernel_size,
                         num_tokens=num_tokens)

    embd = jax.random.normal(xkey, (B, L, input_dim), jnp.float32)
    attention_mask = jnp.array(
        [[1] * L, [1] * (L - 2) + [0, 0]], dtype=jnp.float32)

    out = convbert_contact_forward(params, embd, attention_mask, labels=None)
    logits = jax.block_until_ready(out["logits"])
    assert logits.shape == (B, L, L, num_tokens)
    assert out["loss"] is None

    # exercise the masked cross-entropy path once as well
    labels = jax.random.randint(lkey, (B, L, L), -1, num_tokens)
    out2 = convbert_contact_forward(params, embd, attention_mask, labels=labels)
    loss = jax.block_until_ready(out2["loss"])
    assert bool(jnp.isfinite(loss))

    print("KERNEL_OK")
</pallas_src>

<mosaic_0001>
module attributes {stable_mosaic.version = 11 : i64} {
  func.func @_matmul_bias_kernel(%arg0: i32, %arg1: i32, %arg2: i32, %arg3: memref<16x32xf32, #tpu.memory_space<vmem>>, %arg4: memref<32x64xbf16, #tpu.memory_space<vmem>>, %arg5: memref<1x64xf32, #tpu.memory_space<vmem>>, %arg6: memref<16x64xbf16, #tpu.memory_space<vmem>>, %arg7: memref<16x64xf32, #tpu.memory_space<vmem>>) attributes {dimension_semantics = [#tpu.dimension_semantics<parallel>, #tpu.dimension_semantics<parallel>, #tpu.dimension_semantics<arbitrary>], iteration_bounds = array<i64: 1, 1, 1>, scalar_prefetch = 0 : i64, scratch_operands = 1 : i64, tpu.core_type = #tpu.core_type<tc>, window_params = [{transform_indices = @transform_0, window_bounds = array<i64: 16, 32>}, {transform_indices = @transform_1, window_bounds = array<i64: 32, 64>}, {transform_indices = @transform_2, window_bounds = array<i64: 1, 64>}, {transform_indices = @transform_3, window_bounds = array<i64: 16, 64>}]} {
    %c0_i32 = arith.constant 0 : i32
    %0 = arith.cmpi eq, %arg2, %c0_i32 : i32
    %1 = arith.extui %0 : i1 to i32
    %c0_i32_0 = arith.constant 0 : i32
    %2 = arith.cmpi ne, %1, %c0_i32_0 : i32
    scf.if %2 {
      %cst_10 = arith.constant 0.000000e+00 : f32
      %13 = vector.broadcast %cst_10 : f32 to vector<16x64xf32>
      %c0_11 = arith.constant 0 : index
      %c0_12 = arith.constant 0 : index
      %14 = vector.load %arg7[%c0_11, %c0_12] : memref<16x64xf32, #tpu.memory_space<vmem>>, vector<16x64xf32>
      tpu.vector_store %arg7[%c0_11, %c0_12], %13 {strides = array<i32>} : memref<16x64xf32, #tpu.memory_space<vmem>>, vector<16x64xf32>,
    } else {
    }
    %c0 = arith.constant 0 : index
    %c0_1 = arith.constant 0 : index
    %3 = vector.load %arg7[%c0, %c0_1] : memref<16x64xf32, #tpu.memory_space<vmem>>, vector<16x64xf32>
    %c0_2 = arith.constant 0 : index
    %c0_3 = arith.constant 0 : index
    %4 = vector.load %arg3[%c0_2, %c0_3] : memref<16x32xf32, #tpu.memory_space<vmem>>, vector<16x32xf32>
    %5 = arith.truncf %4 : vector<16x32xf32> to vector<16x32xbf16>
    %c0_4 = arith.constant 0 : index
    %c0_5 = arith.constant 0 : index
    %6 = vector.load %arg4[%c0_4, %c0_5] : memref<32x64xbf16, #tpu.memory_space<vmem>>, vector<32x64xbf16>
    %cst = arith.constant dense<0.000000e+00> : vector<16x64xf32>
    %7 = tpu.matmul %5, %6, %cst {dimension_numbers = #tpu.dot_dimension_numbers<[1], [0], [0], [1], [0, 0, 1, 1], [], []>} : vector<16x32xbf16>, vector<32x64xbf16>, vector<16x64xf32> -> vector<16x64xf32>
    %8 = arith.addf %3, %7 : vector<16x64xf32>
    %c0_6 = arith.constant 0 : index
    %c0_7 = arith.constant 0 : index
    %9 = vector.load %arg7[%c0_6, %c0_7] : memref<16x64xf32, #tpu.memory_space<vmem>>, vector<16x64xf32>
    tpu.vector_store %arg7[%c0_6, %c0_7], %8 {strides = array<i32>} : memref<16x64xf32, #tpu.memory_space<vmem>>, vector<16x64xf32>,
    %c0_i32_8 = arith.constant 0 : i32
    %10 = arith.cmpi eq, %arg2, %c0_i32_8 : i32
    %11 = arith.extui %10 : i1 to i32
    %c0_i32_9 = arith.constant 0 : i32
    %12 = arith.cmpi ne, %11, %c0_i32_9 : i32
    scf.if %12 {
      %c0_10 = arith.constant 0 : index
      %c0_11 = arith.constant 0 : index
      %13 = vector.load %arg7[%c0_10, %c0_11] : memref<16x64xf32, #tpu.memory_space<vmem>>, vector<16x64xf32>
      %c0_12 = arith.constant 0 : index
      %c0_13 = arith.constant 0 : index
      %14 = vector.load %arg5[%c0_12, %c0_13] : memref<1x64xf32, #tpu.memory_space<vmem>>, vector<1x64xf32>
      %15 = vector.broadcast %14 : vector<1x64xf32> to vector<16x64xf32>
      %16 = arith.addf %13, %15 : vector<16x64xf32>
      %17 = arith.truncf %16 : vector<16x64xf32> to vector<16x64xbf16>
      %c0_14 = arith.constant 0 : index
      %c0_15 = arith.constant 0 : index
      %18 = vector.load %arg6[%c0_14, %c0_15] : memref<16x64xbf16, #tpu.memory_space<vmem>>, vector<16x64xbf16>
      tpu.vector_store %arg6[%c0_14, %c0_15], %17 {strides = array<i32>} : memref<16x64xbf16, #tpu.memory_space<vmem>>, vector<16x64xbf16>,
    } else {
    }
    return
  }
  func.func @transform_0(%arg0: i32, %arg1: i32, %arg2: i32) -> (i32, i32) {
    %c0_i32 = arith.constant 0 : i32
    return %arg0, %arg2 : i32, i32
  }
  func.func @transform_1(%arg0: i32, %arg1: i32, %arg2: i32) -> (i32, i32) {
    %c0_i32 = arith.constant 0 : i32
    return %arg2, %arg1 : i32, i32
  }
  func.func @transform_2(%arg0: i32, %arg1: i32, %arg2: i32) -> (i32, i32) {
    %c0_i32 = arith.constant 0 : i32
    %c0_i32_0 = arith.constant 0 : i32
    return %c0_i32, %arg1 : i32, i32
  }
  func.func @transform_3(%arg0: i32, %arg1: i32, %arg2: i32) -> (i32, i32) {
    %c0_i32 = arith.constant 0 : i32
    return %arg0, %arg1 : i32, i32
  }
}

</mosaic_0001>

<llo_original>
// kernel: tpu_custom_call.1
$region0: #{tpu_custom_call.1}
  #allocation0 [shape = 'u32[]', space=smem, size = 0x4, offset = 0x4, fixed_abs, tag = 'smem constant byte address 0x4 - core index']
  #allocation1 [shape = 'u32[72,128]{1,0:T(1,128)}', space=vmem, size = 0x9000, scoped, tag = 'internal scratch']
  #allocation2 [shape = 'f32[16,64]{1,0:T(8,128)}', space=vmem, size = 0x2000, scoped, tag = 'scratch operand']
  %s0 = inlined_call_operand.hbm [shape: f32[16,32], index: 0, kind: input, shape index: {}]
  %s1 = inlined_call_operand.hbm [shape: bf16[32,64], index: 1, kind: input, shape index: {}]
  %s2 = inlined_call_operand.vmem [shape: f32[1,64], index: 2, kind: input, shape index: {}]
  %s3 = inlined_call_operand.hbm [shape: bf16[16,64], index: 3, kind: output, shape index: {}]
  %s4 = sld [smem:[#allocation0]]
  $region38: #{tpu_custom_call.1} parent=0
    _
  %s6 = ssub.s32 1, %s4
  %s7 = scalar_select 0, %s6, %s4
  $region1: #{tpu_custom_call.1} parent=0
    #allocation3 [shape = 'u8[8192]{0}', space=vmem, size = 0x2000, scoped, tag = 'input window, operand 0, single buffered']
    #allocation4 [shape = 's32[1]{0}', space=sflag, size = 0x4, scoped, tag = 'scoped memory for tpu_custom_call.1']
    #allocation5 [shape = 's32[1]{0}', space=sflag, size = 0x4, scoped, tag = 'scoped memory for tpu_custom_call.1']
    #allocation6 [shape = 'u8[8192]{0}', space=vmem, size = 0x2000, scoped, tag = 'input window, operand 1, single buffered']
    #allocation7 [shape = 's32[1]{0}', space=sflag, size = 0x4, scoped, tag = 'scoped memory for tpu_custom_call.1']
    #allocation8 [shape = 'u8[4096]{0}', space=vmem, size = 0x1000, scoped, tag = 'output window, operand 0, single buffered']
    %8 = vsyncpa [#allocation4], 0
    %9 = vsyncpa [#allocation7], 0
    %10 = vsyncpa [#allocation5], 0
    // Predicated region
    $region2: #{tpu_custom_call.1} parent=1 // pred_check
      _
    $region3: #{tpu_custom_call.1} parent=1 // pred_check_branch
      %12 = sbr.rel (0) target = $region5
    $region4: #{tpu_custom_call.1} parent=1 // pred_region
      %14 = vsyncadd [#allocation4], 0
      %s15 = sshll.u32 %s0, 4
      %s16 = int_to_ptr.hbm [resolvable:$true] %s15
      %s17 = sshll.u32 [#allocation3], 4
      %s18 = int_to_ptr.vmem [resolvable:$true] %s17
      %23 = dma.hbm_to_vmem [thread:$0]  %s16, 256, %s18, [#allocation4], 128, 128, 8
    $region5: #{tpu_custom_call.1} parent=1 // pred_fallthru
      _
    // Predicated region
    $region6: #{tpu_custom_call.1} parent=1 // pred_check
      _
    $region7: #{tpu_custom_call.1} parent=1 // pred_check_branch
      %25 = sbr.rel (0) target = $region9
    $region8: #{tpu_custom_call.1} parent=1 // pred_region
      %27 = vsyncadd [#allocation7], 0
      %s28 = sshll.u32 %s1, 4
      %s29 = int_to_ptr.hbm [resolvable:$true] %s28
      %s30 = sshll.u32 [#allocation6], 4
      %s31 = int_to_ptr.vmem [resolvable:$true] %s30
      %36 = dma.hbm_to_vmem [thread:$0]  %s29, 256, %s31, [#allocation7], 64, 64, 4
    $region9: #{tpu_custom_call.1} parent=1 // pred_fallthru
      _
    // Predicated region
    $region10: #{tpu_custom_call.1} parent=1 // pred_check
      _
    $region11: #{tpu_custom_call.1} parent=1 // pred_check_branch
      %38 = sbr.rel (0) target = $region13
    $region12: #{tpu_custom_call.1} parent=1 // pred_region
      _
    $region13: #{tpu_custom_call.1} parent=1 // pred_fallthru
      _
    // Predicated region
    $region14: #{tpu_custom_call.1} parent=1 // pred_check
      _
    $region15: #{tpu_custom_call.1} parent=1 // pred_check_branch
      %40 = sbr.rel (0) target = $region17
    $region16: #{tpu_custom_call.1} parent=1 // pred_region
      %42 = dma.done [#allocation4], 256
    $region17: #{tpu_custom_call.1} parent=1 // pred_fallthru
      _
    // Predicated region
    $region18: #{tpu_custom_call.1} parent=1 // pred_check
      _
    $region19: #{tpu_custom_call.1} parent=1 // pred_check_branch
      %44 = sbr.rel (0) target = $region21
    $region20: #{tpu_custom_call.1} parent=1 // pred_region
      %46 = dma.done [#allocation7], 256
    $region21: #{tpu_custom_call.1} parent=1 // pred_fallthru
      _
    %p48 = scmp.eq.s32.totalorder 0, 0
    // Predicated region
    $region22: #{tpu_custom_call.1} parent=1 // pred_check
      %p49 = pneg %p48
    $region23: #{tpu_custom_call.1} parent=1 // pred_check_branch
      %51 = sbr.rel (%p49) target = $region25
    $region24: #{tpu_custom_call.1} parent=1 // pred_region
      %vm52 = vcmask 523264
      %53 = vst.msk [vmem:[#allocation2] sm:$0xff] %vm52, 0.0
      %54 = vst.msk [vmem:[#allocation2 + $0x8] sm:$0xff] %vm52, 0.0
    $region25: #{tpu_custom_call.1} parent=1 // pred_fallthru
      _
    %v55 = vld [vmem:[#allocation2] sm:$0xff]
    %v56 = vld [vmem:[#allocation2 + $0x8] sm:$0xff]
    %v57 = vld [vmem:[#allocation3] sm:$0xff]
    %v58 = vld [vmem:[#allocation3 + $0x8] sm:$0xff]
    %v59 = vpack.c.bf16 %v58, %v57
    %v60 = vld [vmem:[#allocation6] sm:$0xf]
    %v61 = vld [vmem:[#allocation6 + $0x4] sm:$0xf]
    %v62 = vld [vmem:[#allocation6 + $0x8] sm:$0xf]
    %v63 = vld [vmem:[#allocation6 + $0xc] sm:$0xf]
    %v68 = vunpack.c.l.b16 %v60
    %v69 = vunpack.c.l.b16 %v61
    %v70 = vunpack.c.l.b16 %v62
    %v71 = vunpack.c.l.b16 %v63
    %v72 = vpack.c.b16 %v69, %v68
    %v73 = vpack.c.b16 %v71, %v70
    %vm76 = vcmask 261120
    %v78 = vsel %vm76, %v59, 0
    %80 = vmatpush.bf16.msra.mxu0 0
    %81 = vmatpush.bf16.msra.mxu0 0
    %82 = vmatpush.bf16.msra.mxu0 0
    %83 = vmatpush.bf16.msra.mxu0 0
    %84 = vmatpush.bf16.msra.mxu0 0
    %85 = vmatpush.bf16.msra.mxu0 0
    %86 = vmatpush.bf16.msra.mxu0 %v73
    %87 = vmatpush.bf16.msra.mxu0 %v72
    %88 = vmatmul.bf16.gmra.mxu0 %v78
    %v89 = vpop.f32.mrf.mxu0
    %v90 = vadd.f32 0.0, %v89
    %v91 = vpop.f32.mrf.mxu0
    %v92 = vadd.f32 0.0, %v91
    %93 = vdwg.mxu0
    %v94 = vadd.f32 %v55, %v90
    %v95 = vadd.f32 %v56, %v92
    %vm96 = vcmask 523264
    %97 = vst.msk [vmem:[#allocation2] sm:$0xff] %vm96, %v94
    %98 = vst.msk [vmem:[#allocation2 + $0x8] sm:$0xff] %vm96, %v95
    // Predicated region
    $region26: #{tpu_custom_call.1} parent=1 // pred_check
      %p99 = pneg %p48
    $region27: #{tpu_custom_call.1} parent=1 // pred_check_branch
      %101 = sbr.rel (%p99) target = $region29
    $region28: #{tpu_custom_call.1} parent=1 // pred_region
      %v102 = vld [vmem:[#allocation2] sm:$0xff]
      %v103 = vld [vmem:[#allocation2 + $0x8] sm:$0xff]
      %v104 = vld [vmem:[%s2] sm:$0x1]
      %v106 = vperm.slane %v104, 0
      %v108 = vadd.f32 %v102, %v106
      %v109 = vadd.f32 %v103, %v106
      %v110 = vpack.c.bf16 %v108, %v108
      %v111 = vpack.c.bf16 %v109, %v109
      %vm112 = vcmask 519168
      %113 = vst.msk [vmem:[#allocation8] sm:$0xf] %vm112, %v110
      %114 = vst.msk [vmem:[#allocation8 + $0x4] sm:$0xf] %vm112, %v111
    $region29: #{tpu_custom_call.1} parent=1 // pred_fallthru
      _
    // Predicated region
    $region30: #{tpu_custom_call.1} parent=1 // pred_check
      _
    $region31: #{tpu_custom_call.1} parent=1 // pred_check_branch
      %116 = sbr.rel (0) target = $region33
    $region32: #{tpu_custom_call.1} parent=1 // pred_region
      %118 = vsyncadd [#allocation5], 0
      %s119 = sshll.u32 [#allocation8], 4
      %s120 = int_to_ptr.vmem [resolvable:$true] %s119
      %s121 = sshll.u32 %s3, 4
      %s122 = int_to_ptr.hbm [resolvable:$true] %s121
      %127 = dma.vmem_to_hbm [thread:$0]  %s120, 128, %s122, [#allocation5], 64, 64, 4
    $region33: #{tpu_custom_call.1} parent=1 // pred_fallthru
      _
    // Predicated region
    $region34: #{tpu_custom_call.1} parent=1 // pred_check
      _
    $region35: #{tpu_custom_call.1} parent=1 // pred_check_branch
      %129 = sbr.rel (0) target = $region37
    $region36: #{tpu_custom_call.1} parent=1 // pred_region
      %131 = dma.done [#allocation5], 128
    $region37: #{tpu_custom_call.1} parent=1 // pred_fallthru
      _
    %132 = vsyncpa [#allocation4], 1
    %133 = vsyncpa [#allocation7], 1
    %134 = vsyncpa [#allocation5], 1

</llo_original>
